<compile_context>
chip_gen: v7x
topology: tpu7x:2x2x1
jax: 0.10.0
libtpu: 0.0.40
codegen_flags: <defaults>
</compile_context>

<pallas_src>
import jax
import jax.numpy as jnp
from jax.experimental import pallas as pl
from jax.experimental.pallas import tpu as pltpu


# ---------------------------------------------------------------------------
# Tiling helper: last-dim tile must be a multiple of 128 that divides HW, or
# the full HW extent. Cap the per-block footprint at ~1 MiB.
# ---------------------------------------------------------------------------
def _pick_thw(C, HW, bytes_per_elem=4, target_block_bytes=1 << 20):
    if HW % 128 != 0:
        return HW  # full-extent block (legal; typical only for toy shapes)
    thw = 128
    while (HW % (thw * 2) == 0) and (C * (thw * 2) * bytes_per_elem
                                     <= target_block_bytes):
        thw *= 2
    return thw


# ---------------------------------------------------------------------------
# Pass 1: global average pool over H*W, streamed over HW tiles.
# ---------------------------------------------------------------------------
def _make_pool_kernel(HW, THW):
    inv_hw = 1.0 / float(HW)
    lanes_ok = (THW % 128 == 0)
    n_strips = THW // 128 if lanes_ok else 1

    def kernel(x_ref, mean_ref, acc_ref):
        t = pl.program_id(1)

        @pl.when(t == 0)
        def _init():
            acc_ref[...] = jnp.zeros_like(acc_ref)

        xt = x_ref[0]  # (C, THW) f32
        if lanes_ok:
            # VALU strip accumulation: avoid a wide XLU lane reduce per tile.
            part = xt[:, 0:128]
            for i in range(1, n_strips):
                part = part + xt[:, i * 128:(i + 1) * 128]
        else:
            # Ragged full-extent tile (small HW): single lane reduce is fine.
            part = jnp.sum(xt, axis=-1, keepdims=True)          # (C, 1)
        acc_ref[...] += part

        @pl.when(t == pl.num_programs(1) - 1)
        def _fin():
            total = jnp.sum(acc_ref[...], axis=-1, keepdims=True)  # (C, 1)
            mean_ref[0] = total * inv_hw

    return kernel


# ---------------------------------------------------------------------------
# Pass 2: tiny batched MLP  s = sigmoid(relu(p @ W1^T + b1) @ W2^T + b2)
# (weights arrive pre-transposed, biases as (1, *): no in-kernel transposes)
# ---------------------------------------------------------------------------
def _mlp_kernel(p_ref, w1t_ref, b1_ref, w2t_ref, b2_ref, s_ref):
    p = p_ref[...]                                                  # (B, C)
    h = jnp.dot(p, w1t_ref[...], preferred_element_type=jnp.float32)
    h = jnp.maximum(h + b1_ref[...], 0.0)                           # (B, Cr)
    z = jnp.dot(h, w2t_ref[...], preferred_element_type=jnp.float32)
    s_ref[...] = jax.nn.sigmoid(z + b2_ref[...])                    # (B, C)


# ---------------------------------------------------------------------------
# Pass 3: streaming channel-wise scale, x * s, tiled over HW.
# ---------------------------------------------------------------------------
def _scale_kernel(s_ref, x_ref, o_ref):
    o_ref[0] = x_ref[0] * s_ref[0]       # (C, THW) * (C, 1) broadcast


# ---------------------------------------------------------------------------
# Wrapper
# ---------------------------------------------------------------------------
def ca_layer(x, w1, b1, w2, b2):
    """x: (B, C, H, W) f32; w1: (C//8, C); b1: (C//8,); w2: (C, C//8); b2: (C,)."""
    B, C, H, W = x.shape
    Cr = w1.shape[0]
    HW = H * W
    x_flat = x.reshape(B, C, HW)

    THW = _pick_thw(C, HW)
    T = HW // THW
    lanes_ok = (THW % 128 == 0)
    acc_shape = (C, 128) if lanes_ok else (C, 1)

    # ---- Pass 1: pooled means (B, C, 1) ----
    pooled = pl.pallas_call(
        _make_pool_kernel(HW, THW),
        out_shape=jax.ShapeDtypeStruct((B, C, 1), jnp.float32),
        grid_spec=pltpu.PrefetchScalarGridSpec(
            num_scalar_prefetch=0,
            grid=(B, T),
            in_specs=[pl.BlockSpec((1, C, THW), lambda b, t: (b, 0, t))],
            out_specs=pl.BlockSpec((1, C, 1), lambda b, t: (b, 0, 0)),
            scratch_shapes=[pltpu.VMEM(acc_shape, jnp.float32)],
        ),
        compiler_params=pltpu.CompilerParams(
            dimension_semantics=("parallel", "arbitrary")),
    )(x_flat)

    # ---- Pass 2: batched MLP (tiny) ----
    pooled2d = pooled.reshape(B, C)
    w1t = w1.T            # (C, Cr)  — wrapper-side layout plumbing, free
    w2t = w2.T            # (Cr, C)
    b1_2d = b1.reshape(1, Cr)
    b2_2d = b2.reshape(1, C)

    s2d = pl.pallas_call(
        _mlp_kernel,
        out_shape=jax.ShapeDtypeStruct((B, C), jnp.float32),
        grid_spec=pltpu.PrefetchScalarGridSpec(
            num_scalar_prefetch=0,
            grid=(1,),
            in_specs=[
                pl.BlockSpec((B, C), lambda i: (0, 0)),
                pl.BlockSpec((C, Cr), lambda i: (0, 0)),
                pl.BlockSpec((1, Cr), lambda i: (0, 0)),
                pl.BlockSpec((Cr, C), lambda i: (0, 0)),
                pl.BlockSpec((1, C), lambda i: (0, 0)),
            ],
            out_specs=pl.BlockSpec((B, C), lambda i: (0, 0)),
        ),
    )(pooled2d, w1t, b1_2d, w2t, b2_2d)

    s3 = s2d.reshape(B, C, 1)

    # ---- Pass 3: streamed scale ----
    out = pl.pallas_call(
        _scale_kernel,
        out_shape=jax.ShapeDtypeStruct((B, C, HW), jnp.float32),
        grid_spec=pltpu.PrefetchScalarGridSpec(
            num_scalar_prefetch=0,
            grid=(B, T),
            in_specs=[
                pl.BlockSpec((1, C, 1), lambda b, t: (b, 0, 0)),      # s resident
                pl.BlockSpec((1, C, THW), lambda b, t: (b, 0, t)),    # x streamed
            ],
            out_specs=pl.BlockSpec((1, C, THW), lambda b, t: (b, 0, t)),
        ),
        compiler_params=pltpu.CompilerParams(
            dimension_semantics=("parallel", "parallel")),
    )(s3, x_flat)

    return out.reshape(B, C, H, W)


# ---------------------------------------------------------------------------
# Pure-JAX reference for verification.
# ---------------------------------------------------------------------------
def _ref(x, w1, b1, w2, b2):
    y = jnp.mean(x, axis=(2, 3), keepdims=True)                    # (B,C,1,1)
    h = jnp.einsum("rc,bcij->brij", w1, y) + b1[None, :, None, None]
    h = jnp.maximum(h, 0.0)
    s = jnp.einsum("cr,brij->bcij", w2, h) + b2[None, :, None, None]
    s = jax.nn.sigmoid(s)
    return x * s


if __name__ == "__main__":
    B, C, H, W = 2, 32, 16, 16        # channel must be >= 8 (channel // 8)
    Cr = C // 8

    key = jax.random.PRNGKey(0)
    kx, kw1, kb1, kw2, kb2 = jax.random.split(key, 5)

    x = jax.random.normal(kx, (B, C, H, W), dtype=jnp.float32)
    # Conv2d(C, C//8, 1) weight (Cr, C, 1, 1) -> squeeze to (Cr, C); bias (Cr,)
    w1 = jax.random.normal(kw1, (Cr, C), dtype=jnp.float32) * 0.1
    b1 = jax.random.normal(kb1, (Cr,), dtype=jnp.float32) * 0.1
    # Conv2d(C//8, C, 1) weight (C, Cr, 1, 1) -> (C, Cr); bias (C,)
    w2 = jax.random.normal(kw2, (C, Cr), dtype=jnp.float32) * 0.1
    b2 = jax.random.normal(kb2, (C,), dtype=jnp.float32) * 0.1

    out = jax.block_until_ready(jax.jit(ca_layer)(x, w1, b1, w2, b2))

    ref = _ref(x, w1, b1, w2, b2)
    assert out.shape == (B, C, H, W)
    assert jnp.allclose(out, ref, atol=1e-5, rtol=1e-5), "mismatch vs reference"
    print("KERNEL_OK")
</pallas_src>

<mosaic_0001>
module attributes {stable_mosaic.version = 11 : i64} {
  func.func @kernel(%arg0: i32, %arg1: i32, %arg2: memref<1x32x256xf32, #tpu.memory_space<vmem>>, %arg3: memref<1x32x1xf32, #tpu.memory_space<vmem>>, %arg4: memref<32x128xf32, #tpu.memory_space<vmem>>) attributes {dimension_semantics = [#tpu.dimension_semantics<parallel>, #tpu.dimension_semantics<arbitrary>], iteration_bounds = array<i64: 2, 1>, scalar_prefetch = 0 : i64, scratch_operands = 1 : i64, tpu.core_type = #tpu.core_type<tc>, window_params = [{transform_indices = @transform_0, window_bounds = array<i64: 1, 32, 256>}, {transform_indices = @transform_1, window_bounds = array<i64: 1, 32, 1>}]} {
    %c0_i32 = arith.constant 0 : i32
    %0 = arith.cmpi eq, %arg1, %c0_i32 : i32
    %1 = arith.extui %0 : i1 to i32
    %c0_i32_0 = arith.constant 0 : i32
    %2 = arith.cmpi ne, %1, %c0_i32_0 : i32
    scf.if %2 {
      %cst = arith.constant 0.000000e+00 : f32
      %14 = vector.broadcast %cst : f32 to vector<32x128xf32>
      %c0_9 = arith.constant 0 : index
      %c0_10 = arith.constant 0 : index
      %15 = vector.load %arg4[%c0_9, %c0_10] : memref<32x128xf32, #tpu.memory_space<vmem>>, vector<32x128xf32>
      tpu.vector_store %arg4[%c0_9, %c0_10], %14 {strides = array<i32>} : memref<32x128xf32, #tpu.memory_space<vmem>>, vector<32x128xf32>,
    } else {
    }
    %c0 = arith.constant 0 : index
    %c0_1 = arith.constant 0 : index
    %c0_2 = arith.constant 0 : index
    %3 = vector.load %arg2[%c0, %c0_1, %c0_2] : memref<1x32x256xf32, #tpu.memory_space<vmem>>, vector<1x32x256xf32>
    %4 = vector.shape_cast %3 : vector<1x32x256xf32> to vector<32x256xf32>
    %5 = vector.extract_strided_slice %4 {offsets = [0, 0], sizes = [32, 128], strides = [1, 1]} : vector<32x256xf32> to vector<32x128xf32>
    %6 = vector.extract_strided_slice %4 {offsets = [0, 128], sizes = [32, 128], strides = [1, 1]} : vector<32x256xf32> to vector<32x128xf32>
    %7 = arith.addf %5, %6 : vector<32x128xf32>
    %c0_3 = arith.constant 0 : index
    %c0_4 = arith.constant 0 : index
    %8 = vector.load %arg4[%c0_3, %c0_4] : memref<32x128xf32, #tpu.memory_space<vmem>>, vector<32x128xf32>
    %9 = arith.addf %8, %7 : vector<32x128xf32>
    %c0_5 = arith.constant 0 : index
    %c0_6 = arith.constant 0 : index
    %10 = vector.load %arg4[%c0_5, %c0_6] : memref<32x128xf32, #tpu.memory_space<vmem>>, vector<32x128xf32>
    tpu.vector_store %arg4[%c0_5, %c0_6], %9 {strides = array<i32>} : memref<32x128xf32, #tpu.memory_space<vmem>>, vector<32x128xf32>,
    %c0_i32_7 = arith.constant 0 : i32
    %11 = arith.cmpi eq, %arg1, %c0_i32_7 : i32
    %12 = arith.extui %11 : i1 to i32
    %c0_i32_8 = arith.constant 0 : i32
    %13 = arith.cmpi ne, %12, %c0_i32_8 : i32
    scf.if %13 {
      %c0_9 = arith.constant 0 : index
      %c0_10 = arith.constant 0 : index
      %14 = vector.load %arg4[%c0_9, %c0_10] : memref<32x128xf32, #tpu.memory_space<vmem>>, vector<32x128xf32>
      %cst = arith.constant dense<0.000000e+00> : vector<32xf32>
      %15 = vector.multi_reduction <add>, %14, %cst [1] : vector<32x128xf32> to vector<32xf32>
      %16 = vector.shape_cast %15 : vector<32xf32> to vector<32x1xf32>
      %cst_11 = arith.constant 3.906250e-03 : f32
      %17 = vector.broadcast %cst_11 : f32 to vector<32x1xf32>
      %18 = arith.mulf %16, %17 : vector<32x1xf32>
      %c0_12 = arith.constant 0 : index
      %c0_13 = arith.constant 0 : index
      %c0_14 = arith.constant 0 : index
      %19 = vector.load %arg3[%c0_12, %c0_13, %c0_14] : memref<1x32x1xf32, #tpu.memory_space<vmem>>, vector<1x32x1xf32>
      %20 = vector.shape_cast %19 : vector<1x32x1xf32> to vector<32x1xf32>
      %21 = vector.shape_cast %18 : vector<32x1xf32> to vector<1x32x1xf32>
      tpu.vector_store %arg3[%c0_12, %c0_13, %c0_14], %21 {strides = array<i32>} : memref<1x32x1xf32, #tpu.memory_space<vmem>>, vector<1x32x1xf32>,
    } else {
    }
    return
  }
  func.func @transform_0(%arg0: i32, %arg1: i32) -> (i32, i32, i32) {
    %c0_i32 = arith.constant 0 : i32
    %c0_i32_0 = arith.constant 0 : i32
    return %arg0, %c0_i32, %arg1 : i32, i32, i32
  }
  func.func @transform_1(%arg0: i32, %arg1: i32) -> (i32, i32, i32) {
    %c0_i32 = arith.constant 0 : i32
    %c0_i32_0 = arith.constant 0 : i32
    %c0_i32_1 = arith.constant 0 : i32
    return %arg0, %c0_i32, %c0_i32_0 : i32, i32, i32
  }
}

module attributes {stable_mosaic.version = 11 : i64} {
  func.func @_scale_kernel(%arg0: i32, %arg1: i32, %arg2: memref<1x32x1xf32, #tpu.memory_space<vmem>>, %arg3: memref<1x32x256xf32, #tpu.memory_space<vmem>>, %arg4: memref<1x32x256xf32, #tpu.memory_space<vmem>>) attributes {dimension_semantics = [#tpu.dimension_semantics<parallel>, #tpu.dimension_semantics<parallel>], iteration_bounds = array<i64: 2, 1>, scalar_prefetch = 0 : i64, scratch_operands = 0 : i64, tpu.core_type = #tpu.core_type<tc>, window_params = [{transform_indices = @transform_0, window_bounds = array<i64: 1, 32, 1>}, {transform_indices = @transform_1, window_bounds = array<i64: 1, 32, 256>}, {transform_indices = @transform_2, window_bounds = array<i64: 1, 32, 256>}]} {
    %c0 = arith.constant 0 : index
    %c0_0 = arith.constant 0 : index
    %c0_1 = arith.constant 0 : index
    %0 = vector.load %arg3[%c0, %c0_0, %c0_1] : memref<1x32x256xf32, #tpu.memory_space<vmem>>, vector<1x32x256xf32>
    %1 = vector.shape_cast %0 : vector<1x32x256xf32> to vector<32x256xf32>
    %c0_2 = arith.constant 0 : index
    %c0_3 = arith.constant 0 : index
    %c0_4 = arith.constant 0 : index
    %2 = vector.load %arg2[%c0_2, %c0_3, %c0_4] : memref<1x32x1xf32, #tpu.memory_space<vmem>>, vector<1x32x1xf32>
    %3 = vector.shape_cast %2 : vector<1x32x1xf32> to vector<32x1xf32>
    %4 = vector.broadcast %3 : vector<32x1xf32> to vector<32x256xf32>
    %5 = arith.mulf %1, %4 : vector<32x256xf32>
    %c0_5 = arith.constant 0 : index
    %c0_6 = arith.constant 0 : index
    %c0_7 = arith.constant 0 : index
    %6 = vector.load %arg4[%c0_5, %c0_6, %c0_7] : memref<1x32x256xf32, #tpu.memory_space<vmem>>, vector<1x32x256xf32>
    %7 = vector.shape_cast %6 : vector<1x32x256xf32> to vector<32x256xf32>
    %8 = vector.shape_cast %5 : vector<32x256xf32> to vector<1x32x256xf32>
    tpu.vector_store %arg4[%c0_5, %c0_6, %c0_7], %8 {strides = array<i32>} : memref<1x32x256xf32, #tpu.memory_space<vmem>>, vector<1x32x256xf32>,
    return
  }
  func.func @transform_0(%arg0: i32, %arg1: i32) -> (i32, i32, i32) {
    %c0_i32 = arith.constant 0 : i32
    %c0_i32_0 = arith.constant 0 : i32
    %c0_i32_1 = arith.constant 0 : i32
    return %arg0, %c0_i32, %c0_i32_0 : i32, i32, i32
  }
  func.func @transform_1(%arg0: i32, %arg1: i32) -> (i32, i32, i32) {
    %c0_i32 = arith.constant 0 : i32
    %c0_i32_0 = arith.constant 0 : i32
    return %arg0, %c0_i32, %arg1 : i32, i32, i32
  }
  func.func @transform_2(%arg0: i32, %arg1: i32) -> (i32, i32, i32) {
    %c0_i32 = arith.constant 0 : i32
    %c0_i32_0 = arith.constant 0 : i32
    return %arg0, %c0_i32, %arg1 : i32, i32, i32
  }
}

module attributes {stable_mosaic.version = 11 : i64} {
  func.func @_mlp_kernel(%arg0: i32, %arg1: memref<2x32xf32, #tpu.memory_space<vmem>>, %arg2: memref<32x4xf32, #tpu.memory_space<vmem>>, %arg3: memref<1x4xf32, #tpu.memory_space<vmem>>, %arg4: memref<4x32xf32, #tpu.memory_space<vmem>>, %arg5: memref<1x32xf32, #tpu.memory_space<vmem>>, %arg6: memref<2x32xf32, #tpu.memory_space<vmem>>) attributes {dimension_semantics = [#tpu.dimension_semantics<arbitrary>], iteration_bounds = array<i64: 1>, scalar_prefetch = 0 : i64, scratch_operands = 0 : i64, tpu.core_type = #tpu.core_type<tc>, window_params = [{pipeline_mode = #tpu.pipeline_mode<synchronous>, transform_indices = @transform_0, window_bounds = array<i64: 2, 32>}, {pipeline_mode = #tpu.pipeline_mode<synchronous>, transform_indices = @transform_1, window_bounds = array<i64: 32, 4>}, {pipeline_mode = #tpu.pipeline_mode<synchronous>, transform_indices = @transform_2, window_bounds = array<i64: 1, 4>}, {pipeline_mode = #tpu.pipeline_mode<synchronous>, transform_indices = @transform_3, window_bounds = array<i64: 4, 32>}, {pipeline_mode = #tpu.pipeline_mode<synchronous>, transform_indices = @transform_4, window_bounds = array<i64: 1, 32>}, {pipeline_mode = #tpu.pipeline_mode<synchronous>, transform_indices = @transform_5, window_bounds = array<i64: 2, 32>}]} {
    %c0 = arith.constant 0 : index
    %c0_0 = arith.constant 0 : index
    %0 = vector.load %arg1[%c0, %c0_0] : memref<2x32xf32, #tpu.memory_space<vmem>>, vector<2x32xf32>
    %c0_1 = arith.constant 0 : index
    %c0_2 = arith.constant 0 : index
    %1 = vector.load %arg2[%c0_1, %c0_2] : memref<32x4xf32, #tpu.memory_space<vmem>>, vector<32x4xf32>
    %cst = arith.constant dense<0.000000e+00> : vector<2x4xf32>
    %2 = tpu.matmul %0, %1, %cst {dimension_numbers = #tpu.dot_dimension_numbers<[1], [0], [0], [1], [0, 0, 1, 1], [], []>} : vector<2x32xf32>, vector<32x4xf32>, vector<2x4xf32> -> vector<2x4xf32>
    %c0_3 = arith.constant 0 : index
    %c0_4 = arith.constant 0 : index
    %3 = vector.load %arg3[%c0_3, %c0_4] : memref<1x4xf32, #tpu.memory_space<vmem>>, vector<1x4xf32>
    %4 = vector.broadcast %3 : vector<1x4xf32> to vector<2x4xf32>
    %5 = arith.addf %2, %4 : vector<2x4xf32>
    %cst_5 = arith.constant 0.000000e+00 : f32
    %6 = vector.broadcast %cst_5 : f32 to vector<2x4xf32>
    %7 = arith.maximumf %5, %6 : vector<2x4xf32>
    %c0_6 = arith.constant 0 : index
    %c0_7 = arith.constant 0 : index
    %8 = vector.load %arg4[%c0_6, %c0_7] : memref<4x32xf32, #tpu.memory_space<vmem>>, vector<4x32xf32>
    %cst_8 = arith.constant dense<0.000000e+00> : vector<2x32xf32>
    %9 = tpu.matmul %7, %8, %cst_8 {dimension_numbers = #tpu.dot_dimension_numbers<[1], [0], [0], [1], [0, 0, 1, 1], [], []>} : vector<2x4xf32>, vector<4x32xf32>, vector<2x32xf32> -> vector<2x32xf32>
    %c0_9 = arith.constant 0 : index
    %c0_10 = arith.constant 0 : index
    %10 = vector.load %arg5[%c0_9, %c0_10] : memref<1x32xf32, #tpu.memory_space<vmem>>, vector<1x32xf32>
    %11 = vector.broadcast %10 : vector<1x32xf32> to vector<2x32xf32>
    %12 = arith.addf %9, %11 : vector<2x32xf32>
    %13 = arith.negf %12 : vector<2x32xf32>
    %14 = math.exp %13 : vector<2x32xf32>
    %cst_11 = arith.constant 1.000000e+00 : f32
    %15 = vector.broadcast %cst_11 : f32 to vector<2x32xf32>
    %16 = arith.addf %15, %14 : vector<2x32xf32>
    %17 = arith.divf %15, %16 : vector<2x32xf32>
    %c0_12 = arith.constant 0 : index
    %c0_13 = arith.constant 0 : index
    %18 = vector.load %arg6[%c0_12, %c0_13] : memref<2x32xf32, #tpu.memory_space<vmem>>, vector<2x32xf32>
    tpu.vector_store %arg6[%c0_12, %c0_13], %17 {strides = array<i32>} : memref<2x32xf32, #tpu.memory_space<vmem>>, vector<2x32xf32>,
    return
  }
  func.func @transform_0(%arg0: i32) -> (i32, i32) {
    %c0_i32 = arith.constant 0 : i32
    %c0_i32_0 = arith.constant 0 : i32
    %c0_i32_1 = arith.constant 0 : i32
    return %c0_i32, %c0_i32_0 : i32, i32
  }
  func.func @transform_1(%arg0: i32) -> (i32, i32) {
    %c0_i32 = arith.constant 0 : i32
    %c0_i32_0 = arith.constant 0 : i32
    %c0_i32_1 = arith.constant 0 : i32
    return %c0_i32, %c0_i32_0 : i32, i32
  }
  func.func @transform_2(%arg0: i32) -> (i32, i32) {
    %c0_i32 = arith.constant 0 : i32
    %c0_i32_0 = arith.constant 0 : i32
    %c0_i32_1 = arith.constant 0 : i32
    return %c0_i32, %c0_i32_0 : i32, i32
  }
  func.func @transform_3(%arg0: i32) -> (i32, i32) {
    %c0_i32 = arith.constant 0 : i32
    %c0_i32_0 = arith.constant 0 : i32
    %c0_i32_1 = arith.constant 0 : i32
    return %c0_i32, %c0_i32_0 : i32, i32
  }
  func.func @transform_4(%arg0: i32) -> (i32, i32) {
    %c0_i32 = arith.constant 0 : i32
    %c0_i32_0 = arith.constant 0 : i32
    %c0_i32_1 = arith.constant 0 : i32
    return %c0_i32, %c0_i32_0 : i32, i32
  }
  func.func @transform_5(%arg0: i32) -> (i32, i32) {
    %c0_i32 = arith.constant 0 : i32
    %c0_i32_0 = arith.constant 0 : i32
    %c0_i32_1 = arith.constant 0 : i32
    return %c0_i32, %c0_i32_0 : i32, i32
  }
}

</mosaic_0001>

<llo_original>
// kernel: ca_layer.5
$region0: #{ca_layer.5}
  #allocation0 [shape = 'u32[]', space=smem, size = 0x4, offset = 0x4, fixed_abs, tag = 'smem constant byte address 0x4 - core index']
  #allocation1 [shape = 'u32[144,128]{1,0:T(1,128)}', space=vmem, size = 0x12000, scoped, tag = 'internal scratch']
  %s0 = inlined_call_operand.vmem [shape: f32[2,32,1], index: 0, kind: input, shape index: {}]
  %s1 = inlined_call_operand.vmem [shape: f32[2,32,256], index: 1, kind: input, shape index: {}]
  %s2 = inlined_call_operand.vmem [shape: f32[2,32,256], index: 2, kind: output, shape index: {}]
  %s3 = sld [smem:[#allocation0]]
  $region41: #{ca_layer.5} parent=0
    _
  %s5 = ssub.s32 1, %s3
  %s6 = scalar_select 0, %s5, %s3
  loop: start=0, step=1, limit=4
  $region2: #{ca_layer.5} parent=0 // loop_pre_header
    _
  $region3: #{ca_layer.5} parent=0 // loop_header
    %s8 = sphi 0, %s12
    %p9 = scmp.ge.s32.totalorder %s8, 4
    %s15 = sphi 0, %s27
    %s16 = sphi 0, %s23
    %s17 = sphi 0, %s15
    %s18 = sphi 0, %s16
    %s19 = sphi 0, %s17
    %s20 = sphi 0, %s18
    %s30 = sphi 0, %s32
    %s33 = sphi 0, %s30
    %s34 = sphi 0, %s33
    %s50 = sphi 0, %s34
    %s58 = sphi 0, %s60
    %s61 = sphi 0, %s58
    %s62 = sphi 0, %s61
    %s78 = sphi 0, %s62
    %s86 = sphi 0, %s88
    %s89 = sphi 0, %s86
    %s90 = sphi 0, %s89
    %s106 = sphi 0, %s90
  $region4: #{ca_layer.5} parent=0 // loop_header_branch
    %11 = sbr.rel (%p9) target = $region8
  $region5: #{ca_layer.5} parent=0 // loop_body
    %s13 = ssub.s32 %s8, 1
    %s14 = ssub.s32 %s8, 2
    %s21 = sadd.s32 1, %s16
    %p22 = scmp.ge.s32.totalorder %s21, 1
    %s23 = scalar_select %p22, 0, %s21
    %s24 = sadd.s32 1, %s15
    %s25 = scalar_select %p22, %s24, %s15
    %p26 = scmp.ge.s32.totalorder %s25, 2
    %s27 = scalar_select %p26, 0, %s25
    %s28 = ssub.s32 %s15, %s27
    %p29 = scmp.eq.s32.totalorder %s28, 0
    %s31 = sadd.s32 %s30, 1
    %s32 = scalar_select %p29, %s30, %s31
    %p35 = pneg %p29
    %p36 = scmp.eq.s32.totalorder %s8, 1
    %p37 = por %p35, %p36
    %p38 = scmp.ne.s32.totalorder %s30, %s33
    %p39 = scmp.eq.s32.totalorder %s8, 0
    %p40 = por %p38, %p39
    %p41 = scmp.ne.s32.totalorder %s30, %s33
    %p42 = scmp.eq.s32.totalorder %s13, 1
    %p43 = por %p41, %p42
    %p44 = scmp.ne.s32.totalorder %s33, %s34
    %p45 = scmp.eq.s32.totalorder %s13, 0
    %p46 = por %p44, %p45
    %p47 = scmp.ne.s32.totalorder %s33, %s34
    %p48 = scmp.eq.s32.totalorder %s14, 1
    %p49 = por %p47, %p48
    %p51 = scmp.ne.s32.totalorder %s34, %s50
    %p52 = scmp.eq.s32.totalorder %s14, 0
    %p53 = por %p51, %p52
    %s54 = ssub.s32 %s15, %s27
    %s55 = ssub.s32 %s16, %s23
    %s56 = sor.u32 %s54, %s55
    %p57 = scmp.eq.s32.totalorder %s56, 0
    %s59 = sadd.s32 %s58, 1
    %s60 = scalar_select %p57, %s58, %s59
    %p63 = pneg %p57
    %p64 = scmp.eq.s32.totalorder %s8, 1
    %p65 = por %p63, %p64
    %p66 = scmp.ne.s32.totalorder %s58, %s61
    %p67 = scmp.eq.s32.totalorder %s8, 0
    %p68 = por %p66, %p67
    %p69 = scmp.ne.s32.totalorder %s58, %s61
    %p70 = scmp.eq.s32.totalorder %s13, 1
    %p71 = por %p69, %p70
    %p72 = scmp.ne.s32.totalorder %s61, %s62
    %p73 = scmp.eq.s32.totalorder %s13, 0
    %p74 = por %p72, %p73
    %p75 = scmp.ne.s32.totalorder %s61, %s62
    %p76 = scmp.eq.s32.totalorder %s14, 1
    %p77 = por %p75, %p76
    %p79 = scmp.ne.s32.totalorder %s62, %s78
    %p80 = scmp.eq.s32.totalorder %s14, 0
    %p81 = por %p79, %p80
    %s82 = ssub.s32 %s15, %s27
    %s83 = ssub.s32 %s16, %s23
    %s84 = sor.u32 %s82, %s83
    %p85 = scmp.eq.s32.totalorder %s84, 0
    %s87 = sadd.s32 %s86, 1
    %s88 = scalar_select %p85, %s86, %s87
    %p91 = pneg %p85
    %p92 = scmp.eq.s32.totalorder %s8, 1
    %p93 = por %p91, %p92
    %p94 = scmp.ne.s32.totalorder %s86, %s89
    %p95 = scmp.eq.s32.totalorder %s8, 0
    %p96 = por %p94, %p95
    %p97 = scmp.ne.s32.totalorder %s86, %s89
    %p98 = scmp.eq.s32.totalorder %s13, 1
    %p99 = por %p97, %p98
    %p100 = scmp.ne.s32.totalorder %s89, %s90
    %p101 = scmp.eq.s32.totalorder %s13, 0
    %p102 = por %p100, %p101
    %p103 = scmp.ne.s32.totalorder %s89, %s90
    %p104 = scmp.eq.s32.totalorder %s14, 1
    %p105 = por %p103, %p104
    %p107 = scmp.ne.s32.totalorder %s90, %s106
    %p108 = scmp.eq.s32.totalorder %s14, 0
    %p109 = por %p107, %p108
    %p110 = scmp.le.s32.totalorder 1, %s8
    %p111 = scmp.lt.s32.totalorder %s8, 3
    %p112 = pnand %p110, %p111
    %p113 = pneg %p112
    // Predicated region
    $region9: #{ca_layer.5} parent=5 // pred_check
      _
    $region10: #{ca_layer.5} parent=5 // pred_check_branch
      %115 = sbr.rel (%p112) target = $region12
    $region11: #{ca_layer.5} parent=5 // pred_region
      %s116 = ssub.s32 %s8, 1
    $region12: #{ca_layer.5} parent=5 // pred_fallthru
      _
    %p117 = scmp.lt.s32.totalorder %s8, 2
    // Predicated region
    $region13: #{ca_layer.5} parent=5 // pred_check
      %p118 = pneg %p117
    $region14: #{ca_layer.5} parent=5 // pred_check_branch
      %120 = sbr.rel (%p118) target = $region16
    $region15: #{ca_layer.5} parent=5 // pred_region
      // Predicated region
      $region17: #{ca_layer.5} parent=15 // pred_check
        %p121 = pneg %p40
      $region18: #{ca_layer.5} parent=15 // pred_check_branch
        %123 = sbr.rel (%p121) target = $region20
      $region19: #{ca_layer.5} parent=15 // pred_region
        %p124 = scmp.lt.s32.totalorder %s15, 1
        %s125 = scalar_select %p124, %s15, 1
        %s126 = smul.addr %s125, 4
        %s127 = smul.addr %s126, 8
        %s128 = scalar_lea.vmem %s0, %s127
      $region20: #{ca_layer.5} parent=15 // pred_fallthru
        _
      // Predicated region
      $region21: #{ca_layer.5} parent=15 // pred_check
        %p129 = pneg %p68
      $region22: #{ca_layer.5} parent=15 // pred_check_branch
        %131 = sbr.rel (%p129) target = $region24
      $region23: #{ca_layer.5} parent=15 // pred_region
        %s132 = smul.u32 2, %s16
        %p133 = scmp.lt.s32.totalorder %s15, 1
        %s134 = scalar_select %p133, %s15, 1
        %p135 = scmp.lt.s32.totalorder %s132, 1
        %s136 = scalar_select %p135, %s132, 1
        %s137 = smul.addr %s134, 8
        %s138 = sadd.s32 %s136, %s137
        %s139 = smul.addr %s138, 8
        %s140 = scalar_lea.vmem %s1, %s139
        %s141 = smul.u32 2, %s16
      $region24: #{ca_layer.5} parent=15 // pred_fallthru
        _
    $region16: #{ca_layer.5} parent=5 // pred_fallthru
      _
    %p142 = scmp.le.s32.totalorder 1, %s8
    %p143 = scmp.lt.s32.totalorder %s8, 3
    %p144 = pnand %p142, %p143
    %p145 = pneg %p144
    // Predicated region
    $region25: #{ca_layer.5} parent=5 // pred_check
      _
    $region26: #{ca_layer.5} parent=5 // pred_check_branch
      %147 = sbr.rel (%p144) target = $region28
    $region27: #{ca_layer.5} parent=5 // pred_region
      %s148 = ssub.s32 %s8, 1
      %p149 = scmp.lt.s32.totalorder %s17, 1
      %s150 = scalar_select %p149, %s17, 1
      %s151 = smul.addr %s150, 4
      %s152 = smul.addr %s151, 8
      %s153 = scalar_lea.vmem %s0, %s152
      %p154 = pneg %p46
      %p155 = pneg %p43
      %s156 = smul.u32 2, %s18
      %p157 = scmp.lt.s32.totalorder %s17, 1
      %s158 = scalar_select %p157, %s17, 1
      %p159 = scmp.lt.s32.totalorder %s156, 1
      %s160 = scalar_select %p159, %s156, 1
      %s161 = smul.addr %s158, 8
      %s162 = sadd.s32 %s160, %s161
      %s163 = smul.addr %s162, 8
      %s164 = scalar_lea.vmem %s1, %s163
      %p165 = pneg %p74
      %p166 = pneg %p71
      %p167 = pneg %p102
      %p168 = pneg %p99
      %s169 = smul.u32 2, %s18
      %p170 = scmp.lt.s32.totalorder %s17, 1
      %s171 = scalar_select %p170, %s17, 1
      %p172 = scmp.lt.s32.totalorder %s169, 1
      %s173 = scalar_select %p172, %s169, 1
      %s174 = smul.addr %s171, 8
      %s175 = sadd.s32 %s173, %s174
      %s176 = smul.addr %s175, 8
      %s177 = scalar_lea.vmem %s2, %s176
      %p178 = scmp.lt.s32.totalorder %s17, 1
      %s179 = scalar_select %p178, %s17, 1
      %s180 = smul.addr %s179, 4
      %s181 = smul.addr %s180, 8
      %s182 = scalar_lea.vmem %s0, %s181
      %s183 = smul.u32 2, %s18
      %p184 = scmp.lt.s32.totalorder %s17, 1
      %s185 = scalar_select %p184, %s17, 1
      %p186 = scmp.lt.s32.totalorder %s183, 1
      %s187 = scalar_select %p186, %s183, 1
      %s188 = smul.addr %s185, 8
      %s189 = sadd.s32 %s187, %s188
      %s190 = smul.addr %s189, 8
      %s191 = scalar_lea.vmem %s1, %s190
      %s192 = smul.u32 2, %s18
      %s193 = smul.u32 2, %s18
      %p194 = scmp.lt.s32.totalorder %s17, 1
      %s195 = scalar_select %p194, %s17, 1
      %p196 = scmp.lt.s32.totalorder %s193, 1
      %s197 = scalar_select %p196, %s193, 1
      %s198 = smul.addr %s195, 8
      %s199 = sadd.s32 %s197, %s198
      %s200 = smul.addr %s199, 8
      %s201 = scalar_lea.vmem %s2, %s200
      %s202 = smul.u32 2, %s18
      %v203 = vld [vmem:[%s191] sm:$0xff]
      %v204 = vld [vmem:[%s191 + $0x8] sm:$0xff]
      %v205 = vld [vmem:[%s191 + $0x10] sm:$0xff]
      %v206 = vld [vmem:[%s191 + $0x18] sm:$0xff]
      %v207 = vld [vmem:[%s191 + $0x20] sm:$0xff]
      %v208 = vld [vmem:[%s191 + $0x28] sm:$0xff]
      %v209 = vld [vmem:[%s191 + $0x30] sm:$0xff]
      %v210 = vld [vmem:[%s191 + $0x38] sm:$0xff]
      %v211 = vld [vmem:[%s182] sm:$0xff]
      %v212 = vld [vmem:[%s182 + $0x8] sm:$0xff]
      %v213 = vld [vmem:[%s182 + $0x10] sm:$0xff]
      %v214 = vld [vmem:[%s182 + $0x18] sm:$0xff]
      %216 = vset.pattern.permute.xlu0 0
      %217 = vperm.xlu0 %216, %v211
      %v218 = vpop.permute.xlu0 %217
      %221 = vset.pattern.permute.xlu0 0
      %222 = vperm.xlu0 %221, %v212
      %v223 = vpop.permute.xlu0 %222
      %226 = vset.pattern.permute.xlu0 0
      %227 = vperm.xlu0 %226, %v213
      %v228 = vpop.permute.xlu0 %227
      %231 = vset.pattern.permute.xlu0 0
      %232 = vperm.xlu0 %231, %v214
      %v233 = vpop.permute.xlu0 %232
      %v235 = vmul.f32 %v203, %v218
      %v236 = vmul.f32 %v204, %v218
      %v237 = vmul.f32 %v205, %v223
      %v238 = vmul.f32 %v206, %v223
      %v239 = vmul.f32 %v207, %v228
      %v240 = vmul.f32 %v208, %v228
      %v241 = vmul.f32 %v209, %v233
      %v242 = vmul.f32 %v210, %v233
      %243 = vst [vmem:[%s201] sm:$0xff] %v235
      %244 = vst [vmem:[%s201 + $0x8] sm:$0xff] %v236
      %245 = vst [vmem:[%s201 + $0x10] sm:$0xff] %v237
      %246 = vst [vmem:[%s201 + $0x18] sm:$0xff] %v238
      %247 = vst [vmem:[%s201 + $0x20] sm:$0xff] %v239
      %248 = vst [vmem:[%s201 + $0x28] sm:$0xff] %v240
      %249 = vst [vmem:[%s201 + $0x30] sm:$0xff] %v241
      %250 = vst [vmem:[%s201 + $0x38] sm:$0xff] %v242
      %s251 = smul.u32 2, %s18
      %p252 = scmp.lt.s32.totalorder %s17, 1
      %s253 = scalar_select %p252, %s17, 1
      %p254 = scmp.lt.s32.totalorder %s251, 1
      %s255 = scalar_select %p254, %s251, 1
      %s256 = smul.addr %s253, 8
      %s257 = sadd.s32 %s255, %s256
      %s258 = smul.addr %s257, 8
      %s259 = scalar_lea.vmem %s2, %s258
      // Predicated region
      $region29: #{ca_layer.5} parent=27 // pred_check
        %p260 = pneg %p99
      $region30: #{ca_layer.5} parent=27 // pred_check_branch
        %262 = sbr.rel (%p260) target = $region32
      $region31: #{ca_layer.5} parent=27 // pred_region
        %s263 = smul.u32 2, %s18
      $region32: #{ca_layer.5} parent=27 // pred_fallthru
        _
    $region28: #{ca_layer.5} parent=5 // pred_fallthru
      _
    %p264 = scmp.le.s32.totalorder 2, %s8
    // Predicated region
    $region33: #{ca_layer.5} parent=5 // pred_check
      %p265 = pneg %p264
    $region34: #{ca_layer.5} parent=5 // pred_check_branch
      %267 = sbr.rel (%p265) target = $region36
    $region35: #{ca_layer.5} parent=5 // pred_region
      %s268 = ssub.s32 %s8, 2
      // Predicated region
      $region37: #{ca_layer.5} parent=35 // pred_check
        %p269 = pneg %p105
      $region38: #{ca_layer.5} parent=35 // pred_check_branch
        %271 = sbr.rel (%p269) target = $region40
      $region39: #{ca_layer.5} parent=35 // pred_region
        %s272 = smul.u32 2, %s20
        %p273 = scmp.lt.s32.totalorder %s19, 1
        %s274 = scalar_select %p273, %s19, 1
        %p275 = scmp.lt.s32.totalorder %s272, 1
        %s276 = scalar_select %p275, %s272, 1
        %s277 = smul.addr %s274, 8
        %s278 = sadd.s32 %s276, %s277
        %s279 = smul.addr %s278, 8
        %s280 = scalar_lea.vmem %s2, %s279
      $region40: #{ca_layer.5} parent=35 // pred_fallthru
        _
    $region36: #{ca_layer.5} parent=5 // pred_fallthru
      _
  $region6: #{ca_layer.5} parent=0 // loop_footer
    %s12 = sadd.s32 1, %s8
  $region7: #{ca_layer.5} parent=0 // loop_footer_branch
    %7 = sbr.rel target = $region3
  $region8: #{ca_layer.5} parent=0 // loop_exit
    _

// kernel: ca_layer.3
$region0: #{ca_layer.3}
  #allocation0 [shape = 'u32[]', space=smem, size = 0x4, offset = 0x4, fixed_abs, tag = 'smem constant byte address 0x4 - core index']
  #allocation1 [shape = 'u32[144,128]{1,0:T(1,128)}', space=vmem, size = 0x12000, scoped, tag = 'internal scratch']
  #allocation2 [shape = 'f32[32,128]{1,0:T(8,128)}', space=vmem, size = 0x4000, scoped, tag = 'scratch operand']
  %s0 = inlined_call_operand.vmem [shape: f32[2,32,256], index: 0, kind: input, shape index: {}]
  %s1 = inlined_call_operand.vmem [shape: f32[2,32,1], index: 1, kind: output, shape index: {}]
  %s2 = sld [smem:[#allocation0]]
  $region45: #{ca_layer.3} parent=0
    _
  %s4 = ssub.s32 1, %s2
  %s5 = scalar_select 0, %s4, %s2
  loop: start=0, step=1, limit=4
  $region2: #{ca_layer.3} parent=0 // loop_pre_header
    _
  $region3: #{ca_layer.3} parent=0 // loop_header
    %s7 = sphi 0, %s11
    %p8 = scmp.ge.s32.totalorder %s7, 4
    %s14 = sphi 0, %s26
    %s15 = sphi 0, %s22
    %s16 = sphi 0, %s14
    %s17 = sphi 0, %s15
    %s18 = sphi 0, %s16
    %s19 = sphi 0, %s17
    %s31 = sphi 0, %s33
    %s34 = sphi 0, %s31
    %s35 = sphi 0, %s34
    %s51 = sphi 0, %s35
    %s57 = sphi 0, %s59
    %s60 = sphi 0, %s57
    %s61 = sphi 0, %s60
    %s77 = sphi 0, %s61
  $region4: #{ca_layer.3} parent=0 // loop_header_branch
    %10 = sbr.rel (%p8) target = $region8
  $region5: #{ca_layer.3} parent=0 // loop_body
    %s12 = ssub.s32 %s7, 1
    %s13 = ssub.s32 %s7, 2
    %s20 = sadd.s32 1, %s15
    %p21 = scmp.ge.s32.totalorder %s20, 1
    %s22 = scalar_select %p21, 0, %s20
    %s23 = sadd.s32 1, %s14
    %s24 = scalar_select %p21, %s23, %s14
    %p25 = scmp.ge.s32.totalorder %s24, 2
    %s26 = scalar_select %p25, 0, %s24
    %s27 = ssub.s32 %s14, %s26
    %s28 = ssub.s32 %s15, %s22
    %s29 = sor.u32 %s27, %s28
    %p30 = scmp.eq.s32.totalorder %s29, 0
    %s32 = sadd.s32 %s31, 1
    %s33 = scalar_select %p30, %s31, %s32
    %p36 = pneg %p30
    %p37 = scmp.eq.s32.totalorder %s7, 1
    %p38 = por %p36, %p37
    %p39 = scmp.ne.s32.totalorder %s31, %s34
    %p40 = scmp.eq.s32.totalorder %s7, 0
    %p41 = por %p39, %p40
    %p42 = scmp.ne.s32.totalorder %s31, %s34
    %p43 = scmp.eq.s32.totalorder %s12, 1
    %p44 = por %p42, %p43
    %p45 = scmp.ne.s32.totalorder %s34, %s35
    %p46 = scmp.eq.s32.totalorder %s12, 0
    %p47 = por %p45, %p46
    %p48 = scmp.ne.s32.totalorder %s34, %s35
    %p49 = scmp.eq.s32.totalorder %s13, 1
    %p50 = por %p48, %p49
    %p52 = scmp.ne.s32.totalorder %s35, %s51
    %p53 = scmp.eq.s32.totalorder %s13, 0
    %p54 = por %p52, %p53
    %s55 = ssub.s32 %s14, %s26
    %p56 = scmp.eq.s32.totalorder %s55, 0
    %s58 = sadd.s32 %s57, 1
    %s59 = scalar_select %p56, %s57, %s58
    %p62 = pneg %p56
    %p63 = scmp.eq.s32.totalorder %s7, 1
    %p64 = por %p62, %p63
    %p65 = scmp.ne.s32.totalorder %s57, %s60
    %p66 = scmp.eq.s32.totalorder %s7, 0
    %p67 = por %p65, %p66
    %p68 = scmp.ne.s32.totalorder %s57, %s60
    %p69 = scmp.eq.s32.totalorder %s12, 1
    %p70 = por %p68, %p69
    %p71 = scmp.ne.s32.totalorder %s60, %s61
    %p72 = scmp.eq.s32.totalorder %s12, 0
    %p73 = por %p71, %p72
    %p74 = scmp.ne.s32.totalorder %s60, %s61
    %p75 = scmp.eq.s32.totalorder %s13, 1
    %p76 = por %p74, %p75
    %p78 = scmp.ne.s32.totalorder %s61, %s77
    %p79 = scmp.eq.s32.totalorder %s13, 0
    %p80 = por %p78, %p79
    %p81 = scmp.le.s32.totalorder 1, %s7
    %p82 = scmp.lt.s32.totalorder %s7, 3
    %p83 = pnand %p81, %p82
    %p84 = pneg %p83
    // Predicated region
    $region9: #{ca_layer.3} parent=5 // pred_check
      _
    $region10: #{ca_layer.3} parent=5 // pred_check_branch
      %86 = sbr.rel (%p83) target = $region12
    $region11: #{ca_layer.3} parent=5 // pred_region
      %s87 = ssub.s32 %s7, 1
    $region12: #{ca_layer.3} parent=5 // pred_fallthru
      _
    %p88 = scmp.lt.s32.totalorder %s7, 2
    // Predicated region
    $region13: #{ca_layer.3} parent=5 // pred_check
      %p89 = pneg %p88
    $region14: #{ca_layer.3} parent=5 // pred_check_branch
      %91 = sbr.rel (%p89) target = $region16
    $region15: #{ca_layer.3} parent=5 // pred_region
      // Predicated region
      $region17: #{ca_layer.3} parent=15 // pred_check
        %p92 = pneg %p41
      $region18: #{ca_layer.3} parent=15 // pred_check_branch
        %94 = sbr.rel (%p92) target = $region20
      $region19: #{ca_layer.3} parent=15 // pred_region
        %s95 = smul.u32 2, %s15
        %p96 = scmp.lt.s32.totalorder %s14, 1
        %s97 = scalar_select %p96, %s14, 1
        %p98 = scmp.lt.s32.totalorder %s95, 1
        %s99 = scalar_select %p98, %s95, 1
        %s100 = smul.addr %s97, 8
        %s101 = sadd.s32 %s99, %s100
        %s102 = smul.addr %s101, 8
        %s103 = scalar_lea.vmem %s0, %s102
        %s104 = smul.u32 2, %s15
      $region20: #{ca_layer.3} parent=15 // pred_fallthru
        _
    $region16: #{ca_layer.3} parent=5 // pred_fallthru
      _
    %p105 = scmp.le.s32.totalorder 1, %s7
    %p106 = scmp.lt.s32.totalorder %s7, 3
    %p107 = pnand %p105, %p106
    %p108 = pneg %p107
    // Predicated region
    $region21: #{ca_layer.3} parent=5 // pred_check
      _
    $region22: #{ca_layer.3} parent=5 // pred_check_branch
      %110 = sbr.rel (%p107) target = $region24
    $region23: #{ca_layer.3} parent=5 // pred_region
      %s111 = ssub.s32 %s7, 1
      %s112 = smul.u32 2, %s17
      %p113 = scmp.lt.s32.totalorder %s16, 1
      %s114 = scalar_select %p113, %s16, 1
      %p115 = scmp.lt.s32.totalorder %s112, 1
      %s116 = scalar_select %p115, %s112, 1
      %s117 = smul.addr %s114, 8
      %s118 = sadd.s32 %s116, %s117
      %s119 = smul.addr %s118, 8
      %s120 = scalar_lea.vmem %s0, %s119
      %p121 = pneg %p47
      %p122 = pneg %p44
      %p123 = pneg %p73
      %p124 = pneg %p70
      %p125 = scmp.lt.s32.totalorder %s16, 1
      %s126 = scalar_select %p125, %s16, 1
      %s127 = smul.addr %s126, 4
      %s128 = smul.addr %s127, 8
      %s129 = scalar_lea.vmem %s1, %s128
      %s130 = smul.u32 2, %s17
      %p131 = scmp.lt.s32.totalorder %s16, 1
      %s132 = scalar_select %p131, %s16, 1
      %p133 = scmp.lt.s32.totalorder %s130, 1
      %s134 = scalar_select %p133, %s130, 1
      %s135 = smul.addr %s132, 8
      %s136 = sadd.s32 %s134, %s135
      %s137 = smul.addr %s136, 8
      %s138 = scalar_lea.vmem %s0, %s137
      %s139 = smul.u32 2, %s17
      %p140 = scmp.lt.s32.totalorder %s16, 1
      %s141 = scalar_select %p140, %s16, 1
      %s142 = smul.addr %s141, 4
      %s143 = smul.addr %s142, 8
      %s144 = scalar_lea.vmem %s1, %s143
      %p145 = scmp.eq.s32.totalorder %s17, 0
      // Predicated region
      $region25: #{ca_layer.3} parent=23 // pred_check
        %p146 = pneg %p145
      $region26: #{ca_layer.3} parent=23 // pred_check_branch
        %148 = sbr.rel (%p146) target = $region28
      $region27: #{ca_layer.3} parent=23 // pred_region
        %149 = vst [vmem:[#allocation2] sm:$0xff] 0.0
        %150 = vst [vmem:[#allocation2 + $0x8] sm:$0xff] 0.0
        %151 = vst [vmem:[#allocation2 + $0x10] sm:$0xff] 0.0
        %152 = vst [vmem:[#allocation2 + $0x18] sm:$0xff] 0.0
      $region28: #{ca_layer.3} parent=23 // pred_fallthru
        _
      %v153 = vld [vmem:[%s138] sm:$0xff]
      %v154 = vld [vmem:[%s138 + $0x8] sm:$0xff]
      %v155 = vld [vmem:[%s138 + $0x10] sm:$0xff]
      %v156 = vld [vmem:[%s138 + $0x18] sm:$0xff]
      %v157 = vld [vmem:[%s138 + $0x20] sm:$0xff]
      %v158 = vld [vmem:[%s138 + $0x28] sm:$0xff]
      %v159 = vld [vmem:[%s138 + $0x30] sm:$0xff]
      %v160 = vld [vmem:[%s138 + $0x38] sm:$0xff]
      %v161 = vadd.f32 %v153, %v154
      %v162 = vadd.f32 %v155, %v156
      %v163 = vadd.f32 %v157, %v158
      %v164 = vadd.f32 %v159, %v160
      %v165 = vld [vmem:[#allocation2] sm:$0xff]
      %v166 = vld [vmem:[#allocation2 + $0x8] sm:$0xff]
      %v167 = vld [vmem:[#allocation2 + $0x10] sm:$0xff]
      %v168 = vld [vmem:[#allocation2 + $0x18] sm:$0xff]
      %v169 = vadd.f32 %v165, %v161
      %v170 = vadd.f32 %v166, %v162
      %v171 = vadd.f32 %v167, %v163
      %v172 = vadd.f32 %v168, %v164
      %173 = vst [vmem:[#allocation2] sm:$0xff] %v169
      %174 = vst [vmem:[#allocation2 + $0x8] sm:$0xff] %v170
      %175 = vst [vmem:[#allocation2 + $0x10] sm:$0xff] %v171
      %176 = vst [vmem:[#allocation2 + $0x18] sm:$0xff] %v172
      // Predicated region
      $region29: #{ca_layer.3} parent=23 // pred_check
        %p177 = pneg %p145
      $region30: #{ca_layer.3} parent=23 // pred_check_branch
        %179 = sbr.rel (%p177) target = $region32
      $region31: #{ca_layer.3} parent=23 // pred_region
        %v180 = vld [vmem:[#allocation2] sm:$0xff]
        %v181 = vld [vmem:[#allocation2 + $0x8] sm:$0xff]
        %v182 = vld [vmem:[#allocation2 + $0x10] sm:$0xff]
        %v183 = vld [vmem:[#allocation2 + $0x18] sm:$0xff]
        %184 = vadd.xlane.f32.xlu0 %v180
        %v185 = vpop.xlane.xlu0 %184
        %186 = vadd.xlane.f32.xlu0 %v181
        %v187 = vpop.xlane.xlu0 %186
        %188 = vadd.xlane.f32.xlu0 %v182
        %v189 = vpop.xlane.xlu0 %188
        %190 = vadd.xlane.f32.xlu0 %v183
        %v191 = vpop.xlane.xlu0 %190
        %v192 = vmul.f32 %v185, 0.00390625
        %v193 = vmul.f32 %v187, 0.00390625
        %v194 = vmul.f32 %v189, 0.00390625
        %v195 = vmul.f32 %v191, 0.00390625
        %vm196 = vcmask 7168
        %197 = vst.msk [vmem:[%s144] sm:$0xff] %vm196, %v192
        %198 = vst.msk [vmem:[%s144 + $0x8] sm:$0xff] %vm196, %v193
        %199 = vst.msk [vmem:[%s144 + $0x10] sm:$0xff] %vm196, %v194
        %200 = vst.msk [vmem:[%s144 + $0x18] sm:$0xff] %vm196, %v195
      $region32: #{ca_layer.3} parent=23 // pred_fallthru
        _
      %p201 = scmp.lt.s32.totalorder %s16, 1
      %s202 = scalar_select %p201, %s16, 1
      %s203 = smul.addr %s202, 4
      %s204 = smul.addr %s203, 8
      %s205 = scalar_lea.vmem %s1, %s204
      // Predicated region
      $region33: #{ca_layer.3} parent=23 // pred_check
        %p206 = pneg %p70
      $region34: #{ca_layer.3} parent=23 // pred_check_branch
        %208 = sbr.rel (%p206) target = $region36
      $region35: #{ca_layer.3} parent=23 // pred_region
        _
      $region36: #{ca_layer.3} parent=23 // pred_fallthru
        _
    $region24: #{ca_layer.3} parent=5 // pred_fallthru
      _
    %p209 = scmp.le.s32.totalorder 2, %s7
    // Predicated region
    $region37: #{ca_layer.3} parent=5 // pred_check
      %p210 = pneg %p209
    $region38: #{ca_layer.3} parent=5 // pred_check_branch
      %212 = sbr.rel (%p210) target = $region40
    $region39: #{ca_layer.3} parent=5 // pred_region
      %s213 = ssub.s32 %s7, 2
      // Predicated region
      $region41: #{ca_layer.3} parent=39 // pred_check
        %p214 = pneg %p76
      $region42: #{ca_layer.3} parent=39 // pred_check_branch
        %216 = sbr.rel (%p214) target = $region44
      $region43: #{ca_layer.3} parent=39 // pred_region
        %p217 = scmp.lt.s32.totalorder %s18, 1
        %s218 = scalar_select %p217, %s18, 1
        %s219 = smul.addr %s218, 4
        %s220 = smul.addr %s219, 8
        %s221 = scalar_lea.vmem %s1, %s220
      $region44: #{ca_layer.3} parent=39 // pred_fallthru
        _
    $region40: #{ca_layer.3} parent=5 // pred_fallthru
      _
  $region6: #{ca_layer.3} parent=0 // loop_footer
    %s11 = sadd.s32 1, %s7
  $region7: #{ca_layer.3} parent=0 // loop_footer_branch
    %6 = sbr.rel target = $region3
  $region8: #{ca_layer.3} parent=0 // loop_exit
    _

// kernel: ca_layer.4
$region0: #{ca_layer.4}
  #allocation0 [shape = 'u32[]', space=smem, size = 0x4, offset = 0x4, fixed_abs, tag = 'smem constant byte address 0x4 - core index']
  #allocation1 [shape = 'u32[144,128]{1,0:T(1,128)}', space=vmem, size = 0x12000, scoped, tag = 'internal scratch']
  %s0 = inlined_call_operand.vmem [shape: f32[2,32], index: 0, kind: input, shape index: {}]
  %s1 = inlined_call_operand.vmem [shape: f32[32,4], index: 1, kind: input, shape index: {}]
  %s2 = inlined_call_operand.vmem [shape: f32[1,4], index: 2, kind: input, shape index: {}]
  %s3 = inlined_call_operand.vmem [shape: f32[4,32], index: 3, kind: input, shape index: {}]
  %s4 = inlined_call_operand.vmem [shape: f32[1,32], index: 4, kind: input, shape index: {}]
  %s5 = inlined_call_operand.vmem [shape: f32[2,32], index: 5, kind: output, shape index: {}]
  %s6 = sld [smem:[#allocation0]]
  $region30: #{ca_layer.4} parent=0
    _
  %s8 = ssub.s32 1, %s6
  %s9 = scalar_select 0, %s8, %s6
  // Predicated region
  $region2: #{ca_layer.4} parent=0 // pred_check
    _
  $region3: #{ca_layer.4} parent=0 // pred_check_branch
    %11 = sbr.rel (0) target = $region5
  $region4: #{ca_layer.4} parent=0 // pred_region
    _
  $region5: #{ca_layer.4} parent=0 // pred_fallthru
    _
  // Predicated region
  $region6: #{ca_layer.4} parent=0 // pred_check
    _
  $region7: #{ca_layer.4} parent=0 // pred_check_branch
    %13 = sbr.rel (0) target = $region9
  $region8: #{ca_layer.4} parent=0 // pred_region
    _
  $region9: #{ca_layer.4} parent=0 // pred_fallthru
    _
  // Predicated region
  $region10: #{ca_layer.4} parent=0 // pred_check
    _
  $region11: #{ca_layer.4} parent=0 // pred_check_branch
    %15 = sbr.rel (0) target = $region13
  $region12: #{ca_layer.4} parent=0 // pred_region
    _
  $region13: #{ca_layer.4} parent=0 // pred_fallthru
    _
  // Predicated region
  $region14: #{ca_layer.4} parent=0 // pred_check
    _
  $region15: #{ca_layer.4} parent=0 // pred_check_branch
    %17 = sbr.rel (0) target = $region17
  $region16: #{ca_layer.4} parent=0 // pred_region
    _
  $region17: #{ca_layer.4} parent=0 // pred_fallthru
    _
  // Predicated region
  $region18: #{ca_layer.4} parent=0 // pred_check
    _
  $region19: #{ca_layer.4} parent=0 // pred_check_branch
    %19 = sbr.rel (0) target = $region21
  $region20: #{ca_layer.4} parent=0 // pred_region
    _
  $region21: #{ca_layer.4} parent=0 // pred_fallthru
    _
  %v20 = vld [vmem:[%s0] sm:$0x3]
  %v21 = vld [vmem:[%s1] sm:$0xff]
  %v22 = vld [vmem:[%s1 + $0x8] sm:$0xff]
  %v23 = vld [vmem:[%s1 + $0x10] sm:$0xff]
  %v24 = vld [vmem:[%s1 + $0x18] sm:$0xff]
  %v25 = vld [vmem:[%s2] sm:$0x1]
  %v27 = vlaneseq
  %v28 = vshrl.u32 %v27, 7
  %v29 = vsub.s32 0, %v28
  %v30 = vrot.slane %v25, %v29
  %vm32 = vcmask 261120
  %v34 = vsel %vm32, %v20, 0
  %36 = vmatprep.subr.mxu0 0.0
  %37 = vmatpush1.msra.mxu0 %v21
  %38 = vmatprep.subr.mxu0 0.0
  %39 = vmatpush1.msra.mxu0 %v22
  %40 = vmatprep.subr.mxu0 0.0
  %41 = vmatpush1.msra.mxu0 %v23
  %42 = vmatprep.subr.mxu0 0.0
  %43 = vmatpush1.msra.mxu0 %v24
  %44 = vmatprep.subr.mxu0 0.0
  %45 = vmatpush1.msra.mxu0 0.0
  %46 = vmatprep.subr.mxu0 0.0
  %47 = vmatpush1.msra.mxu0 0.0
  %48 = vmatprep.subr.mxu0 0.0
  %49 = vmatpush1.msra.mxu0 0.0
  %50 = vmatprep.subr.mxu0 0.0
  %51 = vmatpush1.msra.mxu0 0.0
  %52 = vmatprep.subr.mxu0 0.0
  %53 = vmatpush1.msra.mxu0 0.0
  %54 = vmatprep.subr.mxu0 0.0
  %55 = vmatpush1.msra.mxu0 0.0
  %56 = vmatprep.subr.mxu0 0.0
  %57 = vmatpush1.msra.mxu0 0.0
  %58 = vmatprep.subr.mxu0 0.0
  %59 = vmatpush1.msra.mxu0 0.0
  %60 = vmatprep.subr.mxu0 0.0
  %61 = vmatpush1.msra.mxu0 0.0
  %62 = vmatprep.subr.mxu0 0.0
  %63 = vmatpush1.msra.mxu0 0.0
  %64 = vmatprep.subr.mxu0 0.0
  %65 = vmatpush1.msra.mxu0 0.0
  %66 = vmatprep.subr.mxu0 0.0
  %67 = vmatpush1.msra.mxu0 0.0
  %68 = vmatprep.subr.mxu0 0.0
  %69 = vmatpush1.msra.mxu0 0.0
  %70 = vmatprep.subr.mxu0 0.0
  %71 = vmatpush1.msra.mxu0 0.0
  %72 = vmatprep.subr.mxu0 0.0
  %73 = vmatpush1.msra.mxu0 0.0
  %74 = vmatprep.subr.mxu0 0.0
  %75 = vmatpush1.msra.mxu0 0.0
  %76 = vmatprep.subr.mxu0 0.0
  %77 = vmatpush1.msra.mxu0 0.0
  %78 = vmatprep.subr.mxu0 0.0
  %79 = vmatpush1.msra.mxu0 0.0
  %80 = vmatprep.subr.mxu0 0.0
  %81 = vmatpush1.msra.mxu0 0.0
  %82 = vmatprep.subr.mxu0 0.0
  %83 = vmatpush1.msra.mxu0 0.0
  %84 = vmatprep.subr.mxu0 0.0
  %85 = vmatpush1.msra.mxu0 0.0
  %86 = vmatprep.subr.mxu0 0.0
  %87 = vmatpush1.msra.mxu0 0.0
  %88 = vmatprep.subr.mxu0 0.0
  %89 = vmatpush1.msra.mxu0 0.0
  %90 = vmatprep.subr.mxu0 0.0
  %91 = vmatpush1.msra.mxu0 0.0
  %92 = vmatprep.subr.mxu0 0.0
  %93 = vmatpush1.msra.mxu0 0.0
  %94 = vmatprep.subr.mxu0 0.0
  %95 = vmatpush1.msra.mxu0 0.0
  %96 = vmatprep.subr.mxu0 0.0
  %97 = vmatpush1.msra.mxu0 0.0
  %98 = vmatprep.subr.mxu0 0.0
  %99 = vmatpush1.msra.mxu0 0.0
  %100 = vmatprep.mubr.f32.mxu0 0.0
  %101 = vmatmul.mubr.f32.gmra.mrb[0].mxu0 %v34
  %v102 = vpop.f32.mrb[0].mxu0
  %v103 = vadd.f32 %v30, %v102
  %v104 = vpop.f32.mrb[0].mxu0
  %105 = vdwg.mxu0
  %v106 = vmax.f32 %v103, 0.0
  %v107 = vld [vmem:[%s3] sm:$0xf]
  %v108 = vld [vmem:[%s4] sm:$0x1]
  %v110 = vlaneseq
  %v111 = vshrl.u32 %v110, 7
  %v112 = vsub.s32 0, %v111
  %v113 = vrot.slane %v108, %v112
  %vm115 = vcmask 31744
  %v117 = vsel %vm115, %v106, 0
  %vm119 = vcmask 1043456
  %v121 = vsel %vm119, %v107, 0
  %123 = vmatprep.subr.mxu0 0.0
  %124 = vmatpush1.msra.mxu0 %v121
  %125 = vmatprep.subr.mxu0 0.0
  %126 = vmatpush1.msra.mxu0 0.0
  %127 = vmatprep.subr.mxu0 0.0
  %128 = vmatpush1.msra.mxu0 0.0
  %129 = vmatprep.subr.mxu0 0.0
  %130 = vmatpush1.msra.mxu0 0.0
  %131 = vmatprep.subr.mxu0 0.0
  %132 = vmatpush1.msra.mxu0 0.0
  %133 = vmatprep.subr.mxu0 0.0
  %134 = vmatpush1.msra.mxu0 0.0
  %135 = vmatprep.subr.mxu0 0.0
  %136 = vmatpush1.msra.mxu0 0.0
  %137 = vmatprep.subr.mxu0 0.0
  %138 = vmatpush1.msra.mxu0 0.0
  %139 = vmatprep.subr.mxu0 0.0
  %140 = vmatpush1.msra.mxu0 0.0
  %141 = vmatprep.subr.mxu0 0.0
  %142 = vmatpush1.msra.mxu0 0.0
  %143 = vmatprep.subr.mxu0 0.0
  %144 = vmatpush1.msra.mxu0 0.0
  %145 = vmatprep.subr.mxu0 0.0
  %146 = vmatpush1.msra.mxu0 0.0
  %147 = vmatprep.subr.mxu0 0.0
  %148 = vmatpush1.msra.mxu0 0.0
  %149 = vmatprep.subr.mxu0 0.0
  %150 = vmatpush1.msra.mxu0 0.0
  %151 = vmatprep.subr.mxu0 0.0
  %152 = vmatpush1.msra.mxu0 0.0
  %153 = vmatprep.subr.mxu0 0.0
  %154 = vmatpush1.msra.mxu0 0.0
  %155 = vmatprep.subr.mxu0 0.0
  %156 = vmatpush1.msra.mxu0 0.0
  %157 = vmatprep.subr.mxu0 0.0
  %158 = vmatpush1.msra.mxu0 0.0
  %159 = vmatprep.subr.mxu0 0.0
  %160 = vmatpush1.msra.mxu0 0.0
  %161 = vmatprep.subr.mxu0 0.0
  %162 = vmatpush1.msra.mxu0 0.0
  %163 = vmatprep.subr.mxu0 0.0
  %164 = vmatpush1.msra.mxu0 0.0
  %165 = vmatprep.subr.mxu0 0.0
  %166 = vmatpush1.msra.mxu0 0.0
  %167 = vmatprep.subr.mxu0 0.0
  %168 = vmatpush1.msra.mxu0 0.0
  %169 = vmatprep.subr.mxu0 0.0
  %170 = vmatpush1.msra.mxu0 0.0
  %171 = vmatprep.subr.mxu0 0.0
  %172 = vmatpush1.msra.mxu0 0.0
  %173 = vmatprep.subr.mxu0 0.0
  %174 = vmatpush1.msra.mxu0 0.0
  %175 = vmatprep.subr.mxu0 0.0
  %176 = vmatpush1.msra.mxu0 0.0
  %177 = vmatprep.subr.mxu0 0.0
  %178 = vmatpush1.msra.mxu0 0.0
  %179 = vmatprep.subr.mxu0 0.0
  %180 = vmatpush1.msra.mxu0 0.0
  %181 = vmatprep.subr.mxu0 0.0
  %182 = vmatpush1.msra.mxu0 0.0
  %183 = vmatprep.subr.mxu0 0.0
  %184 = vmatpush1.msra.mxu0 0.0
  %185 = vmatprep.subr.mxu0 0.0
  %186 = vmatpush1.msra.mxu0 0.0
  %187 = vmatprep.mubr.f32.mxu0 0.0
  %188 = vmatmul.mubr.f32.gmra.mrb[0].mxu0 %v117
  %v189 = vpop.f32.mrb[0].mxu0
  %v190 = vadd.f32 %v113, %v189
  %v191 = vpop.f32.mrb[0].mxu0
  %192 = vdwg.mxu0
  %v193 = vxor.u32 %v190, 2147483648
  %v194 = vmul.f32 %v193, 1.442695
  %v195 = vpow.pop %v194
  %v196 = vadd.f32 %v195, 1.0
  %v197 = vrcp.pop %v196
  %v198 = vmul.f32 1.0, %v197
  %vm199 = vcmask 254976
  %200 = vst.msk [vmem:[%s5] sm:$0x3] %vm199, %v198
  // Predicated region
  $region22: #{ca_layer.4} parent=0 // pred_check
    _
  $region23: #{ca_layer.4} parent=0 // pred_check_branch
    %202 = sbr.rel (0) target = $region25
  $region24: #{ca_layer.4} parent=0 // pred_region
    _
  $region25: #{ca_layer.4} parent=0 // pred_fallthru
    _
  // Predicated region
  $region26: #{ca_layer.4} parent=0 // pred_check
    _
  $region27: #{ca_layer.4} parent=0 // pred_check_branch
    %204 = sbr.rel (0) target = $region29
  $region28: #{ca_layer.4} parent=0 // pred_region
    _
  $region29: #{ca_layer.4} parent=0 // pred_fallthru
    _

</llo_original>
